<compile_context>
chip_gen: v6e
topology: v6e:2x2x1
jax: 0.10.0
libtpu: 0.0.40
codegen_flags: <defaults>
</compile_context>

<pallas_src>
import math
import functools

import jax
import jax.numpy as jnp
from jax import lax
from jax.experimental import pallas as pl
from jax.experimental.pallas import tpu as pltpu

# Small, lane-friendly model dimensions (synthetic "base_model.config").
B = 2        # batch
S = 8        # sequence length
H = 128      # hidden_size
V = 256      # vocab_size
BS = B * S   # flattened rows fed to the MXU

assert S & (S - 1) == 0, "S must be a power of two (shift-based batch index)"
LOG2_S = int(math.log2(S))

NEG_INF = -1e9
INV_SQRT_H = 1.0 / math.sqrt(H)


# ------------------------------ Pallas kernel -------------------------------

def _fused_forward_kernel(x_ref, kmask_ref, tgt_ref,
                          w_attn_ref, w_lm_ref, b_lm_ref,
                          logits_ref, loss_ref):
    """Masked self-attention (+res) -> LM head -> logits + shifted CE, all flat (B*S, .).

    x_ref:      (BS, H)    bf16   token embeddings, batch folded into rows
    kmask_ref:  (1, BS)    f32    key-padding mask (attention_mask flattened)
    tgt_ref:    (BS, 1)    int32  shifted next-token targets; -1 = ignore
    w_attn_ref: (H, 4H)    bf16   packed [Wq | Wk | Wv | Wo]
    w_lm_ref:   (H, V)     bf16 ; b_lm_ref (1, V) f32
    logits_ref: (BS, V)    f32    (VMEM, lane-dense V)
    loss_ref:   (1, 1)     f32    (SMEM scalar)
    """
    x = x_ref[...]                                                  # (BS, H) bf16

    # Fused QKV projection: one MXU weight push, 384-wide output, f32 accumulate.
    qkv = jnp.dot(x, w_attn_ref[:, 0:3 * H],
                  preferred_element_type=jnp.float32)               # (BS, 3H) f32
    q = qkv[:, 0:H].astype(jnp.bfloat16)
    k = qkv[:, H:2 * H].astype(jnp.bfloat16)
    v = qkv[:, 2 * H:3 * H].astype(jnp.bfloat16)

    # Scores: contract q and k over the feature axis directly (no transpose op).
    scores = lax.dot_general(q, k, (((1,), (1,)), ((), ())),
                             preferred_element_type=jnp.float32)    # (BS, BS) f32
    scores = scores * INV_SQRT_H

    # Block-diagonal causal + key-padding mask, built on the VPU from iota.
    row = lax.broadcasted_iota(jnp.int32, (BS, BS), 0)
    col = lax.broadcasted_iota(jnp.int32, (BS, BS), 1)
    same_batch = (row >> LOG2_S) == (col >> LOG2_S)
    key_ok = kmask_ref[...] > 0.5                                   # (1, BS) bool
    allowed = (col <= row) & same_batch & key_ok                    # (BS, BS) bool
    scores = jnp.where(allowed, scores, NEG_INF)

    # Numerically-stable f32 softmax over keys; EUP reciprocal for the denominator.
    scores = scores - jnp.max(scores, axis=-1, keepdims=True)
    p = jnp.exp(scores)
    p = p * pl.reciprocal(jnp.sum(p, axis=-1, keepdims=True), approx=True)

    ctx = jnp.dot(p.astype(jnp.bfloat16), v,
                  preferred_element_type=jnp.float32)               # (BS, H) f32

    # Output projection + residual.
    h = jnp.dot(ctx.astype(jnp.bfloat16), w_attn_ref[:, 3 * H:4 * H],
                preferred_element_type=jnp.float32) + x.astype(jnp.float32)

    # LM head: (BS, H) @ (H, V) + bias, lane-dense V output.
    logits = jnp.dot(h.astype(jnp.bfloat16), w_lm_ref[...],
                     preferred_element_type=jnp.float32) + b_lm_ref[...]   # (BS, V)
    logits_ref[...] = logits

    # Shifted token cross-entropy (HF causal-LM style) on the flat (BS, V) tile,
    # computed while logits are VMEM-resident. Targets were pre-shifted; -1 = ignore.
    zmax = jnp.max(logits, axis=-1, keepdims=True)
    z = logits - zmax
    logp = z - jnp.log(jnp.sum(jnp.exp(z), axis=-1, keepdims=True))        # (BS, V)

    tgt = tgt_ref[...]                                                     # (BS, 1) i32
    onehot = lax.broadcasted_iota(jnp.int32, (BS, V), 1) == tgt            # (BS, V)
    picked = jnp.sum(jnp.where(onehot, logp, 0.0), axis=-1, keepdims=True) # (BS, 1)
    valid = (tgt >= 0).astype(jnp.float32)                                 # (BS, 1)
    loss_ref[0, 0] = -jnp.sum(picked * valid) / jnp.maximum(jnp.sum(valid), 1.0)


# ------------------------------ Pallas wrapper -------------------------------

def fused_forward(x2, kmask, tgt, w_attn, w_lm, b_lm):
    return pl.pallas_call(
        _fused_forward_kernel,
        out_shape=(
            jax.ShapeDtypeStruct((BS, V), jnp.float32),   # flat logits
            jax.ShapeDtypeStruct((1, 1), jnp.float32),    # scalar loss
        ),
        in_specs=[pl.BlockSpec(memory_space=pltpu.MemorySpace.VMEM)] * 6,
        out_specs=(
            pl.BlockSpec(memory_space=pltpu.MemorySpace.VMEM),
            pl.BlockSpec(memory_space=pltpu.MemorySpace.SMEM),
        ),
    )(x2, kmask, tgt, w_attn, w_lm, b_lm)


# ------------------------------- Model glue ----------------------------------

def init_params(key):
    ks = jax.random.split(key, 8)
    scale_h = 1.0 / math.sqrt(H)
    wq = (jax.random.normal(ks[1], (H, H), jnp.float32) * scale_h).astype(jnp.bfloat16)
    wk = (jax.random.normal(ks[2], (H, H), jnp.float32) * scale_h).astype(jnp.bfloat16)
    wv = (jax.random.normal(ks[3], (H, H), jnp.float32) * scale_h).astype(jnp.bfloat16)
    wo = (jax.random.normal(ks[4], (H, H), jnp.float32) * scale_h).astype(jnp.bfloat16)
    params = {
        "embed": jax.random.normal(ks[0], (V, H), jnp.float32) * 0.02,
        # Individual weights kept for the f32 reference; packed copy fed to the kernel.
        "wq": wq, "wk": wk, "wv": wv, "wo": wo,
        "w_attn_packed": jnp.concatenate([wq, wk, wv, wo], axis=1),   # (H, 4H) bf16
        "w_lm": (jax.random.normal(ks[5], (H, V), jnp.float32) * scale_h).astype(jnp.bfloat16),
        "b_lm": jnp.zeros((1, V), jnp.float32),
        # The outer HeadlineGenerator.lm_head is defined in __init__ but NEVER used in
        # forward(); initialized only for parameter-shape fidelity.
        "unused_outer_lm_head_w": jax.random.normal(ks[6], (H, V), jnp.float32) * scale_h,
        "unused_outer_lm_head_b": jnp.zeros((V,), jnp.float32),
    }
    return params


@functools.partial(jax.jit, static_argnames=())
def headline_generator_forward(params, input_ids, attention_mask, labels):
    # Embedding lookup stays in plain JAX (gather); everything else is one Pallas call.
    x2 = jnp.take(params["embed"], input_ids.reshape(-1), axis=0
                  ).astype(jnp.bfloat16)                                    # (BS, H)

    kmask = attention_mask.astype(jnp.float32).reshape(1, BS)               # (1, BS)

    # HF causal-LM loss shift: position t predicts labels[t+1]; invalid targets -> -1.
    shifted_labels = jnp.concatenate(
        [labels[:, 1:], jnp.full((B, 1), -1, labels.dtype)], axis=1)        # (B, S)
    shifted_mask = jnp.concatenate(
        [attention_mask[:, 1:], jnp.zeros((B, 1), attention_mask.dtype)], axis=1)
    tgt = jnp.where(shifted_mask > 0, shifted_labels, -1
                    ).reshape(BS, 1).astype(jnp.int32)                      # (BS, 1)

    logits_flat, loss = fused_forward(
        x2, kmask, tgt,
        params["w_attn_packed"], params["w_lm"], params["b_lm"])

    return {"loss": loss[0, 0], "logits": logits_flat.reshape(B, S, V)}


# ------------------------ pure-JAX reference (f32) ---------------------------

def reference_forward(params, input_ids, attention_mask, labels):
    x = jnp.take(params["embed"], input_ids, axis=0)                        # (B,S,H) f32
    wq = params["wq"].astype(jnp.float32); wk = params["wk"].astype(jnp.float32)
    wv = params["wv"].astype(jnp.float32); wo = params["wo"].astype(jnp.float32)
    w_lm = params["w_lm"].astype(jnp.float32)

    q = x @ wq; k = x @ wk; v = x @ wv
    scores = jnp.einsum('bqd,bkd->bqk', q, k) / math.sqrt(H)
    mask_f = attention_mask.astype(jnp.float32)
    causal = jnp.tril(jnp.ones((S, S), jnp.float32))
    allowed = causal[None, :, :] * mask_f[:, None, :]
    scores = jnp.where(allowed > 0.0, scores, NEG_INF)
    p = jax.nn.softmax(scores, axis=-1)
    ctx = jnp.einsum('bqk,bkd->bqd', p, v)
    h = ctx @ wo + x
    logits = h @ w_lm + params["b_lm"]

    logp = jax.nn.log_softmax(logits, axis=-1)
    tgt = labels[:, 1:]
    lp = jnp.take_along_axis(logp[:, :-1], tgt[..., None], axis=-1)[..., 0]
    tm = mask_f[:, 1:]
    loss = -jnp.sum(lp * tm) / jnp.maximum(jnp.sum(tm), 1.0)
    return loss, logits


# ---------------------------------- Main -------------------------------------

if __name__ == "__main__":
    key = jax.random.PRNGKey(0)
    kp, ki, kl = jax.random.split(key, 3)

    params = init_params(kp)

    input_ids = jax.random.randint(ki, (B, S), 0, V, dtype=jnp.int32)
    labels = jax.random.randint(kl, (B, S), 0, V, dtype=jnp.int32)
    # attention_mask: last two positions of batch element 1 are padding
    attention_mask = jnp.ones((B, S), jnp.int32).at[1, -2:].set(0)

    outputs = headline_generator_forward(params, input_ids, attention_mask, labels)
    jax.block_until_ready(outputs)

    assert outputs["logits"].shape == (B, S, V)
    assert outputs["loss"].shape == ()
    assert bool(jnp.isfinite(outputs["loss"]))

    # Loose correctness check against f32 reference (kernel uses bf16 MXU operands).
    ref_loss, ref_logits = reference_forward(params, input_ids, attention_mask, labels)
    assert float(jnp.max(jnp.abs(outputs["logits"] - ref_logits))) < 2e-2
    assert bool(jnp.allclose(outputs["loss"], ref_loss, atol=1e-2, rtol=1e-2))

    print("KERNEL_OK")
</pallas_src>

<mosaic_0001>
module attributes {stable_mosaic.version = 11 : i64} {
  func.func @_fused_forward_kernel(%arg0: memref<16x128xbf16, #tpu.memory_space<vmem>>, %arg1: memref<1x16xf32, #tpu.memory_space<vmem>>, %arg2: memref<16x1xi32, #tpu.memory_space<vmem>>, %arg3: memref<128x512xbf16, #tpu.memory_space<vmem>>, %arg4: memref<128x256xbf16, #tpu.memory_space<vmem>>, %arg5: memref<1x256xf32, #tpu.memory_space<vmem>>, %arg6: memref<16x256xf32, #tpu.memory_space<vmem>>, %arg7: memref<1x1xf32, #tpu.memory_space<smem>>) attributes {dimension_semantics = [], scalar_prefetch = 0 : i64, scratch_operands = 0 : i64, tpu.core_type = #tpu.core_type<tc>} {
    %c0 = arith.constant 0 : index
    %c0_0 = arith.constant 0 : index
    %0 = vector.load %arg0[%c0, %c0_0] : memref<16x128xbf16, #tpu.memory_space<vmem>>, vector<16x128xbf16>
    %c0_1 = arith.constant 0 : index
    %c0_2 = arith.constant 0 : index
    %1 = vector.load %arg3[%c0_1, %c0_2] : memref<128x512xbf16, #tpu.memory_space<vmem>>, vector<128x384xbf16>
    %cst = arith.constant dense<0.000000e+00> : vector<16x384xf32>
    %2 = tpu.matmul %0, %1, %cst {dimension_numbers = #tpu.dot_dimension_numbers<[1], [0], [0], [1], [0, 0, 1, 1], [], []>} : vector<16x128xbf16>, vector<128x384xbf16>, vector<16x384xf32> -> vector<16x384xf32>
    %3 = vector.extract_strided_slice %2 {offsets = [0, 0], sizes = [16, 128], strides = [1, 1]} : vector<16x384xf32> to vector<16x128xf32>
    %4 = arith.truncf %3 : vector<16x128xf32> to vector<16x128xbf16>
    %5 = vector.extract_strided_slice %2 {offsets = [0, 128], sizes = [16, 128], strides = [1, 1]} : vector<16x384xf32> to vector<16x128xf32>
    %6 = arith.truncf %5 : vector<16x128xf32> to vector<16x128xbf16>
    %7 = vector.extract_strided_slice %2 {offsets = [0, 256], sizes = [16, 128], strides = [1, 1]} : vector<16x384xf32> to vector<16x128xf32>
    %8 = arith.truncf %7 : vector<16x128xf32> to vector<16x128xbf16>
    %cst_3 = arith.constant dense<0.000000e+00> : vector<16x16xf32>
    %9 = tpu.matmul %4, %6, %cst_3 {dimension_numbers = #tpu.dot_dimension_numbers<[1], [1], [0], [0], [0, 0, 1, 0], [], []>} : vector<16x128xbf16>, vector<16x128xbf16>, vector<16x16xf32> -> vector<16x16xf32>
    %cst_4 = arith.constant 0.0883883461 : f32
    %10 = vector.broadcast %cst_4 : f32 to vector<16x16xf32>
    %11 = arith.mulf %9, %10 : vector<16x16xf32>
    %12 = tpu.iota {dimensions = array<i32: 0>} : vector<16x16xi32>
    %13 = tpu.iota {dimensions = array<i32: 1>} : vector<16x16xi32>
    %c3_i32 = arith.constant 3 : i32
    %14 = vector.broadcast %c3_i32 : i32 to vector<16x16xi32>
    %15 = arith.shrsi %12, %14 : vector<16x16xi32>
    %c3_i32_5 = arith.constant 3 : i32
    %16 = vector.broadcast %c3_i32_5 : i32 to vector<16x16xi32>
    %17 = arith.shrsi %13, %16 : vector<16x16xi32>
    %18 = arith.cmpi eq, %15, %17 : vector<16x16xi32>
    %c0_6 = arith.constant 0 : index
    %c0_7 = arith.constant 0 : index
    %19 = vector.load %arg1[%c0_6, %c0_7] : memref<1x16xf32, #tpu.memory_space<vmem>>, vector<1x16xf32>
    %cst_8 = arith.constant 5.000000e-01 : f32
    %20 = vector.broadcast %cst_8 : f32 to vector<1x16xf32>
    %21 = arith.cmpf ogt, %19, %20 : vector<1x16xf32>
    %22 = arith.cmpi sle, %13, %12 : vector<16x16xi32>
    %23 = arith.andi %22, %18 : vector<16x16xi1>
    %24 = vector.broadcast %21 : vector<1x16xi1> to vector<16x16xi1>
    %25 = arith.andi %23, %24 : vector<16x16xi1>
    %cst_9 = arith.constant -1.000000e+09 : f32
    %26 = vector.broadcast %cst_9 : f32 to vector<16x16xf32>
    %27 = arith.select %25, %11, %26 : vector<16x16xi1>, vector<16x16xf32>
    %cst_10 = arith.constant dense<0xFF800000> : vector<16xf32>
    %28 = vector.multi_reduction <maximumf>, %27, %cst_10 [1] : vector<16x16xf32> to vector<16xf32>
    %29 = vector.shape_cast %28 : vector<16xf32> to vector<16x1xf32>
    %30 = vector.broadcast %29 : vector<16x1xf32> to vector<16x16xf32>
    %31 = arith.subf %27, %30 : vector<16x16xf32>
    %32 = math.exp %31 : vector<16x16xf32>
    %cst_11 = arith.constant dense<0.000000e+00> : vector<16xf32>
    %33 = vector.multi_reduction <add>, %32, %cst_11 [1] : vector<16x16xf32> to vector<16xf32>
    %34 = vector.shape_cast %33 : vector<16xf32> to vector<16x1xf32>
    %35 = tpu.reciprocal %34 {approx = true} : vector<16x1xf32> -> vector<16x1xf32>
    %36 = vector.broadcast %35 : vector<16x1xf32> to vector<16x16xf32>
    %37 = arith.mulf %32, %36 : vector<16x16xf32>
    %38 = arith.truncf %37 : vector<16x16xf32> to vector<16x16xbf16>
    %cst_12 = arith.constant dense<0.000000e+00> : vector<16x128xf32>
    %39 = tpu.matmul %38, %8, %cst_12 {dimension_numbers = #tpu.dot_dimension_numbers<[1], [0], [0], [1], [0, 0, 1, 1], [], []>} : vector<16x16xbf16>, vector<16x128xbf16>, vector<16x128xf32> -> vector<16x128xf32>
    %40 = arith.truncf %39 : vector<16x128xf32> to vector<16x128xbf16>
    %c0_13 = arith.constant 0 : index
    %c384 = arith.constant 384 : index
    %41 = vector.load %arg3[%c0_13, %c384] : memref<128x512xbf16, #tpu.memory_space<vmem>>, vector<128x128xbf16>
    %cst_14 = arith.constant dense<0.000000e+00> : vector<16x128xf32>
    %42 = tpu.matmul %40, %41, %cst_14 {dimension_numbers = #tpu.dot_dimension_numbers<[1], [0], [0], [1], [0, 0, 1, 1], [], []>} : vector<16x128xbf16>, vector<128x128xbf16>, vector<16x128xf32> -> vector<16x128xf32>
    %43 = arith.extf %0 : vector<16x128xbf16> to vector<16x128xf32>
    %44 = arith.addf %42, %43 : vector<16x128xf32>
    %45 = arith.truncf %44 : vector<16x128xf32> to vector<16x128xbf16>
    %c0_15 = arith.constant 0 : index
    %c0_16 = arith.constant 0 : index
    %46 = vector.load %arg4[%c0_15, %c0_16] : memref<128x256xbf16, #tpu.memory_space<vmem>>, vector<128x256xbf16>
    %cst_17 = arith.constant dense<0.000000e+00> : vector<16x256xf32>
    %47 = tpu.matmul %45, %46, %cst_17 {dimension_numbers = #tpu.dot_dimension_numbers<[1], [0], [0], [1], [0, 0, 1, 1], [], []>} : vector<16x128xbf16>, vector<128x256xbf16>, vector<16x256xf32> -> vector<16x256xf32>
    %c0_18 = arith.constant 0 : index
    %c0_19 = arith.constant 0 : index
    %48 = vector.load %arg5[%c0_18, %c0_19] : memref<1x256xf32, #tpu.memory_space<vmem>>, vector<1x256xf32>
    %49 = vector.broadcast %48 : vector<1x256xf32> to vector<16x256xf32>
    %50 = arith.addf %47, %49 : vector<16x256xf32>
    %c0_20 = arith.constant 0 : index
    %c0_21 = arith.constant 0 : index
    %51 = vector.load %arg6[%c0_20, %c0_21] : memref<16x256xf32, #tpu.memory_space<vmem>>, vector<16x256xf32>
    tpu.vector_store %arg6[%c0_20, %c0_21], %50 {strides = array<i32>} : memref<16x256xf32, #tpu.memory_space<vmem>>, vector<16x256xf32>,
    %cst_22 = arith.constant dense<0xFF800000> : vector<16xf32>
    %52 = vector.multi_reduction <maximumf>, %50, %cst_22 [1] : vector<16x256xf32> to vector<16xf32>
    %53 = vector.shape_cast %52 : vector<16xf32> to vector<16x1xf32>
    %54 = vector.broadcast %53 : vector<16x1xf32> to vector<16x256xf32>
    %55 = arith.subf %50, %54 : vector<16x256xf32>
    %56 = math.exp %55 : vector<16x256xf32>
    %cst_23 = arith.constant dense<0.000000e+00> : vector<16xf32>
    %57 = vector.multi_reduction <add>, %56, %cst_23 [1] : vector<16x256xf32> to vector<16xf32>
    %58 = vector.shape_cast %57 : vector<16xf32> to vector<16x1xf32>
    %59 = math.log %58 : vector<16x1xf32>
    %60 = vector.broadcast %59 : vector<16x1xf32> to vector<16x256xf32>
    %61 = arith.subf %55, %60 : vector<16x256xf32>
    %c0_24 = arith.constant 0 : index
    %c0_25 = arith.constant 0 : index
    %62 = vector.load %arg2[%c0_24, %c0_25] : memref<16x1xi32, #tpu.memory_space<vmem>>, vector<16x1xi32>
    %63 = tpu.iota {dimensions = array<i32: 1>} : vector<16x256xi32>
    %64 = vector.broadcast %62 : vector<16x1xi32> to vector<16x256xi32>
    %65 = arith.cmpi eq, %63, %64 : vector<16x256xi32>
    %cst_26 = arith.constant 0.000000e+00 : f32
    %66 = vector.broadcast %cst_26 : f32 to vector<16x256xf32>
    %67 = arith.select %65, %61, %66 : vector<16x256xi1>, vector<16x256xf32>
    %cst_27 = arith.constant dense<0.000000e+00> : vector<16xf32>
    %68 = vector.multi_reduction <add>, %67, %cst_27 [1] : vector<16x256xf32> to vector<16xf32>
    %69 = vector.shape_cast %68 : vector<16xf32> to vector<16x1xf32>
    %c0_i32 = arith.constant 0 : i32
    %70 = vector.broadcast %c0_i32 : i32 to vector<16x1xi32>
    %71 = arith.cmpi sge, %62, %70 : vector<16x1xi32>
    %72 = arith.extui %71 : vector<16x1xi1> to vector<16x1xi32>
    %73 = arith.sitofp %72 : vector<16x1xi32> to vector<16x1xf32>
    %74 = arith.mulf %69, %73 : vector<16x1xf32>
    %75 = vector.shape_cast %74 : vector<16x1xf32> to vector<1x16x1xf32>
    %cst_28 = arith.constant dense<0.000000e+00> : vector<1xf32>
    %76 = vector.multi_reduction <add>, %75, %cst_28 [1, 2] : vector<1x16x1xf32> to vector<1xf32>
    %77 = vector.shape_cast %76 : vector<1xf32> to vector<1x1x1xf32>
    %78 = vector.extract %77[0, 0, 0] : f32 from vector<1x1x1xf32>
    %cst_29 = arith.constant 0.000000e+00 : f32
    %79 = arith.subf %cst_29, %78 : f32
    %80 = vector.shape_cast %73 : vector<16x1xf32> to vector<1x16x1xf32>
    %cst_30 = arith.constant dense<0.000000e+00> : vector<1xf32>
    %81 = vector.multi_reduction <add>, %80, %cst_30 [1, 2] : vector<1x16x1xf32> to vector<1xf32>
    %82 = vector.shape_cast %81 : vector<1xf32> to vector<1x1x1xf32>
    %83 = vector.extract %82[0, 0, 0] : f32 from vector<1x1x1xf32>
    %cst_31 = arith.constant 1.000000e+00 : f32
    %84 = arith.maximumf %83, %cst_31 : f32
    %85 = arith.divf %79, %84 : f32
    %c0_32 = arith.constant 0 : index
    %c0_33 = arith.constant 0 : index
    %86 = memref.load %arg7[%c0_32, %c0_33] : memref<1x1xf32, #tpu.memory_space<smem>>
    memref.store %85, %arg7[%c0_32, %c0_33] : memref<1x1xf32, #tpu.memory_space<smem>>
    return
  }
}

</mosaic_0001>

<llo_original>
// kernel: headline_generator_forward.1
$region0: #{headline_generator_forward.1}
  #allocation0 [shape = 'u32[]', space=smem, size = 0x4, offset = 0x4, fixed_abs, tag = 'smem constant byte address 0x4 - core index']
  #allocation1 [shape = 'u32[144,128]{1,0:T(1,128)}', space=vmem, size = 0x12000, scoped, tag = 'internal scratch']
  %s0 = inlined_call_operand.vmem [shape: bf16[16,128], index: 0, kind: input, shape index: {}]
  %s1 = inlined_call_operand.vmem [shape: f32[1,16], index: 1, kind: input, shape index: {}]
  %s2 = inlined_call_operand.vmem [shape: s32[16,1], index: 2, kind: input, shape index: {}]
  %s3 = inlined_call_operand.hbm [shape: bf16[128,512], index: 3, kind: input, shape index: {}]
  %s4 = inlined_call_operand.vmem [shape: bf16[128,256], index: 4, kind: input, shape index: {}]
  %s5 = inlined_call_operand.vmem [shape: f32[1,256], index: 5, kind: input, shape index: {}]
  %s6 = inlined_call_operand.hbm [shape: f32[16,256], index: 6, kind: output, shape index: {0}]
  %s7 = inlined_call_operand.hbm [shape: f32[1,1], index: 7, kind: output, shape index: {1}]
  %8 = xla_tuple %s6, %s7
  %s9 = sld [smem:[#allocation0]]
  $region46: #{headline_generator_forward.1} parent=0
    _
  %s11 = ssub.s32 1, %s9
  %s12 = scalar_select 0, %s11, %s9
  $region1: #{headline_generator_forward.1} parent=0
    #allocation2 [shape = 'u8[131072]{0}', space=vmem, size = 0x20000, scoped, tag = 'input window, operand 3, single buffered']
    #allocation3 [shape = 's32[1]{0}', space=sflag, size = 0x4, scoped, tag = 'scoped memory for headline_generator_forward.1']
    #allocation4 [shape = 's32[1]{0}', space=sflag, size = 0x4, scoped, tag = 'scoped memory for headline_generator_forward.1']
    #allocation5 [shape = 's32[1]{0}', space=sflag, size = 0x4, scoped, tag = 'scoped memory for headline_generator_forward.1']
    #allocation6 [shape = 'u8[16384]{0}', space=vmem, size = 0x4000, scoped, tag = 'output window, operand 0, single buffered']
    #allocation7 [shape = 'u8[512]{0}', space=smem, size = 0x200, scoped, tag = 'output window, operand 1, single buffered']
    %13 = vsyncpa [#allocation3], 0
    %14 = vsyncpa [#allocation4], 0
    %15 = vsyncpa [#allocation5], 0
    // Predicated region
    $region2: #{headline_generator_forward.1} parent=1 // pred_check
      _
    $region3: #{headline_generator_forward.1} parent=1 // pred_check_branch
      %17 = sbr.rel (0) target = $region5
    $region4: #{headline_generator_forward.1} parent=1 // pred_region
      _
    $region5: #{headline_generator_forward.1} parent=1 // pred_fallthru
      _
    // Predicated region
    $region6: #{headline_generator_forward.1} parent=1 // pred_check
      _
    $region7: #{headline_generator_forward.1} parent=1 // pred_check_branch
      %19 = sbr.rel (0) target = $region9
    $region8: #{headline_generator_forward.1} parent=1 // pred_region
      _
    $region9: #{headline_generator_forward.1} parent=1 // pred_fallthru
      _
    // Predicated region
    $region10: #{headline_generator_forward.1} parent=1 // pred_check
      _
    $region11: #{headline_generator_forward.1} parent=1 // pred_check_branch
      %21 = sbr.rel (0) target = $region13
    $region12: #{headline_generator_forward.1} parent=1 // pred_region
      _
    $region13: #{headline_generator_forward.1} parent=1 // pred_fallthru
      _
    // Predicated region
    $region14: #{headline_generator_forward.1} parent=1 // pred_check
      _
    $region15: #{headline_generator_forward.1} parent=1 // pred_check_branch
      %23 = sbr.rel (0) target = $region17
    $region16: #{headline_generator_forward.1} parent=1 // pred_region
      %s25 = ssub.s32 4096, 4096
      %26 = vsyncadd [#allocation3], %s25
      %s27 = sshll.u32 [#allocation2], 4
      %s28 = int_to_ptr.vmem [resolvable:$true] %s27
      %33 = dma.hbm_to_vmem [thread:$0]  %s3, 4096, %s28, [#allocation3], 256, 256, 16
    $region17: #{headline_generator_forward.1} parent=1 // pred_fallthru
      _
    // Predicated region
    $region18: #{headline_generator_forward.1} parent=1 // pred_check
      _
    $region19: #{headline_generator_forward.1} parent=1 // pred_check_branch
      %35 = sbr.rel (0) target = $region21
    $region20: #{headline_generator_forward.1} parent=1 // pred_region
      _
    $region21: #{headline_generator_forward.1} parent=1 // pred_fallthru
      _
    // Predicated region
    $region22: #{headline_generator_forward.1} parent=1 // pred_check
      _
    $region23: #{headline_generator_forward.1} parent=1 // pred_check_branch
      %37 = sbr.rel (0) target = $region25
    $region24: #{headline_generator_forward.1} parent=1 // pred_region
      _
    $region25: #{headline_generator_forward.1} parent=1 // pred_fallthru
      _
    // Predicated region
    $region26: #{headline_generator_forward.1} parent=1 // pred_check
      _
    $region27: #{headline_generator_forward.1} parent=1 // pred_check_branch
      %39 = sbr.rel (0) target = $region29
    $region28: #{headline_generator_forward.1} parent=1 // pred_region
      %40 = dma.done [#allocation3], 4096
    $region29: #{headline_generator_forward.1} parent=1 // pred_fallthru
      _
    %v42 = vld [vmem:[%s0] sm:$0xf]
    %v43 = vld [vmem:[%s0 + $0x4] sm:$0xf]
    %v44 = vld [vmem:[#allocation2] sm:$0xff]
    %v45 = vld [vmem:[#allocation2 + $0x8] sm:$0xf]
    %v46 = vld [vmem:[#allocation2 + $0x10] sm:$0xff]
    %v47 = vld [vmem:[#allocation2 + $0x18] sm:$0xf]
    %v48 = vld [vmem:[#allocation2 + $0x20] sm:$0xff]
    %v49 = vld [vmem:[#allocation2 + $0x28] sm:$0xf]
    %v50 = vld [vmem:[#allocation2 + $0x30] sm:$0xff]
    %v51 = vld [vmem:[#allocation2 + $0x38] sm:$0xf]
    %v52 = vld [vmem:[#allocation2 + $0x40] sm:$0xff]
    %v53 = vld [vmem:[#allocation2 + $0x48] sm:$0xf]
    %v54 = vld [vmem:[#allocation2 + $0x50] sm:$0xff]
    %v55 = vld [vmem:[#allocation2 + $0x58] sm:$0xf]
    %v56 = vld [vmem:[#allocation2 + $0x60] sm:$0xff]
    %v57 = vld [vmem:[#allocation2 + $0x68] sm:$0xf]
    %v58 = vld [vmem:[#allocation2 + $0x70] sm:$0xff]
    %v59 = vld [vmem:[#allocation2 + $0x78] sm:$0xf]
    %v60 = vld [vmem:[#allocation2 + $0x80] sm:$0xff]
    %v61 = vld [vmem:[#allocation2 + $0x88] sm:$0xf]
    %v62 = vld [vmem:[#allocation2 + $0x90] sm:$0xff]
    %v63 = vld [vmem:[#allocation2 + $0x98] sm:$0xf]
    %v64 = vld [vmem:[#allocation2 + $0xa0] sm:$0xff]
    %v65 = vld [vmem:[#allocation2 + $0xa8] sm:$0xf]
    %v66 = vld [vmem:[#allocation2 + $0xb0] sm:$0xff]
    %v67 = vld [vmem:[#allocation2 + $0xb8] sm:$0xf]
    %v68 = vld [vmem:[#allocation2 + $0xc0] sm:$0xff]
    %v69 = vld [vmem:[#allocation2 + $0xc8] sm:$0xf]
    %v70 = vld [vmem:[#allocation2 + $0xd0] sm:$0xff]
    %v71 = vld [vmem:[#allocation2 + $0xd8] sm:$0xf]
    %v72 = vld [vmem:[#allocation2 + $0xe0] sm:$0xff]
    %v73 = vld [vmem:[#allocation2 + $0xe8] sm:$0xf]
    %v74 = vld [vmem:[#allocation2 + $0xf0] sm:$0xff]
    %v75 = vld [vmem:[#allocation2 + $0xf8] sm:$0xf]
    %v78 = vunpack.c.l.b16 %v42
    %v79 = vunpack.c.l.b16 %v43
    %v80 = vpack.c.b16 %v79, %v78
    %v114 = vunpack.c.l.b16 %v44
    %v115 = vunpack.c.h.b16 %v44
    %v116 = vunpack.c.l.b16 %v45
    %v117 = vunpack.c.l.b16 %v46
    %v118 = vunpack.c.h.b16 %v46
    %v119 = vunpack.c.l.b16 %v47
    %v120 = vunpack.c.l.b16 %v48
    %v121 = vunpack.c.h.b16 %v48
    %v122 = vunpack.c.l.b16 %v49
    %v123 = vunpack.c.l.b16 %v50
    %v124 = vunpack.c.h.b16 %v50
    %v125 = vunpack.c.l.b16 %v51
    %v126 = vunpack.c.l.b16 %v52
    %v127 = vunpack.c.h.b16 %v52
    %v128 = vunpack.c.l.b16 %v53
    %v129 = vunpack.c.l.b16 %v54
    %v130 = vunpack.c.h.b16 %v54
    %v131 = vunpack.c.l.b16 %v55
    %v132 = vunpack.c.l.b16 %v56
    %v133 = vunpack.c.h.b16 %v56
    %v134 = vunpack.c.l.b16 %v57
    %v135 = vunpack.c.l.b16 %v58
    %v136 = vunpack.c.h.b16 %v58
    %v137 = vunpack.c.l.b16 %v59
    %v138 = vunpack.c.l.b16 %v60
    %v139 = vunpack.c.h.b16 %v60
    %v140 = vunpack.c.l.b16 %v61
    %v141 = vunpack.c.l.b16 %v62
    %v142 = vunpack.c.h.b16 %v62
    %v143 = vunpack.c.l.b16 %v63
    %v144 = vunpack.c.l.b16 %v64
    %v145 = vunpack.c.h.b16 %v64
    %v146 = vunpack.c.l.b16 %v65
    %v147 = vunpack.c.l.b16 %v66
    %v148 = vunpack.c.h.b16 %v66
    %v149 = vunpack.c.l.b16 %v67
    %v150 = vunpack.c.l.b16 %v68
    %v151 = vunpack.c.h.b16 %v68
    %v152 = vunpack.c.l.b16 %v69
    %v153 = vunpack.c.l.b16 %v70
    %v154 = vunpack.c.h.b16 %v70
    %v155 = vunpack.c.l.b16 %v71
    %v156 = vunpack.c.l.b16 %v72
    %v157 = vunpack.c.h.b16 %v72
    %v158 = vunpack.c.l.b16 %v73
    %v159 = vunpack.c.l.b16 %v74
    %v160 = vunpack.c.h.b16 %v74
    %v161 = vunpack.c.l.b16 %v75
    %v162 = vpack.c.b16 %v117, %v114
    %v163 = vpack.c.b16 %v118, %v115
    %v164 = vpack.c.b16 %v119, %v116
    %v165 = vpack.c.b16 %v123, %v120
    %v166 = vpack.c.b16 %v124, %v121
    %v167 = vpack.c.b16 %v125, %v122
    %v168 = vpack.c.b16 %v129, %v126
    %v169 = vpack.c.b16 %v130, %v127
    %v170 = vpack.c.b16 %v131, %v128
    %v171 = vpack.c.b16 %v135, %v132
    %v172 = vpack.c.b16 %v136, %v133
    %v173 = vpack.c.b16 %v137, %v134
    %v174 = vpack.c.b16 %v141, %v138
    %v175 = vpack.c.b16 %v142, %v139
    %v176 = vpack.c.b16 %v143, %v140
    %v177 = vpack.c.b16 %v147, %v144
    %v178 = vpack.c.b16 %v148, %v145
    %v179 = vpack.c.b16 %v149, %v146
    %v180 = vpack.c.b16 %v153, %v150
    %v181 = vpack.c.b16 %v154, %v151
    %v182 = vpack.c.b16 %v155, %v152
    %v183 = vpack.c.b16 %v159, %v156
    %v184 = vpack.c.b16 %v160, %v157
    %v185 = vpack.c.b16 %v161, %v158
    %210 = vmatprep.subr.bf16.mxu0 %v184
    %211 = vmatpush1.bf16.msra.mxu0 %v183
    %212 = vmatprep.subr.bf16.mxu0 %v181
    %213 = vmatpush1.bf16.msra.mxu0 %v180
    %214 = vmatprep.subr.bf16.mxu0 %v178
    %215 = vmatpush1.bf16.msra.mxu0 %v177
    %216 = vmatprep.subr.bf16.mxu0 %v175
    %217 = vmatpush1.bf16.msra.mxu0 %v174
    %218 = vmatprep.subr.bf16.mxu0 %v172
    %219 = vmatpush1.bf16.msra.mxu0 %v171
    %220 = vmatprep.subr.bf16.mxu0 %v169
    %221 = vmatpush1.bf16.msra.mxu0 %v168
    %222 = vmatprep.subr.bf16.mxu0 %v166
    %223 = vmatpush1.bf16.msra.mxu0 %v165
    %224 = vmatprep.subr.bf16.mxu0 %v163
    %225 = vmatpush1.bf16.msra.mxu0 %v162
    %226 = vmatprep.subr.bf16.mxu0 0
    %227 = vmatpush2.bf16.msra.mxu0 0
    %228 = vmatprep.subr.bf16.mxu0 0
    %229 = vmatpush2.bf16.msra.mxu0 0
    %230 = vmatprep.subr.bf16.mxu0 0
    %231 = vmatpush2.bf16.msra.mxu0 0
    %232 = vmatprep.subr.bf16.mxu0 0
    %233 = vmatpush2.bf16.msra.mxu0 0
    %234 = vmatprep.subr.bf16.mxu0 0
    %235 = vmatpush2.bf16.msra.mxu0 0
    %236 = vmatprep.subr.bf16.mxu0 0
    %237 = vmatpush2.bf16.msra.mxu0 0
    %238 = vmatprep.subr.bf16.mxu0 0
    %239 = vmatpush2.bf16.msra.mxu0 0
    %240 = vmatprep.subr.bf16.mxu0 0
    %241 = vmatpush2.bf16.msra.mxu0 0
    %242 = vmatprep.mubr.bf16.mxu0 0
    %243 = vmatmul.mubr.bf16.gmra.mxu0 %v80
    %v244 = vpop.f32.mrf.mxu0
    %v245 = vadd.f32 0.0, %v244
    %v246 = vpop.f32.mrf.mxu0
    %v247 = vadd.f32 0.0, %v246
    %v248 = vpop.f32.mrf.mxu0
    %v249 = vadd.f32 0.0, %v248
    %v250 = vpop.f32.mrf.mxu0
    %v251 = vadd.f32 0.0, %v250
    %252 = vdwg.mxu0
    %253 = vmatprep.subr.bf16.mxu0 0
    %254 = vmatpush1.bf16.msra.mxu0 %v185
    %255 = vmatprep.subr.bf16.mxu0 0
    %256 = vmatpush1.bf16.msra.mxu0 %v182
    %257 = vmatprep.subr.bf16.mxu0 0
    %258 = vmatpush1.bf16.msra.mxu0 %v179
    %259 = vmatprep.subr.bf16.mxu0 0
    %260 = vmatpush1.bf16.msra.mxu0 %v176
    %261 = vmatprep.subr.bf16.mxu0 0
    %262 = vmatpush1.bf16.msra.mxu0 %v173
    %263 = vmatprep.subr.bf16.mxu0 0
    %264 = vmatpush1.bf16.msra.mxu0 %v170
    %265 = vmatprep.subr.bf16.mxu0 0
    %266 = vmatpush1.bf16.msra.mxu0 %v167
    %267 = vmatprep.subr.bf16.mxu0 0
    %268 = vmatpush1.bf16.msra.mxu0 %v164
    %269 = vmatprep.subr.bf16.mxu0 0
    %270 = vmatpush2.bf16.msra.mxu0 0
    %271 = vmatprep.subr.bf16.mxu0 0
    %272 = vmatpush2.bf16.msra.mxu0 0
    %273 = vmatprep.subr.bf16.mxu0 0
    %274 = vmatpush2.bf16.msra.mxu0 0
    %275 = vmatprep.subr.bf16.mxu0 0
    %276 = vmatpush2.bf16.msra.mxu0 0
    %277 = vmatprep.subr.bf16.mxu0 0
    %278 = vmatpush2.bf16.msra.mxu0 0
    %279 = vmatprep.subr.bf16.mxu0 0
    %280 = vmatpush2.bf16.msra.mxu0 0
    %281 = vmatprep.subr.bf16.mxu0 0
    %282 = vmatpush2.bf16.msra.mxu0 0
    %283 = vmatprep.subr.bf16.mxu0 0
    %284 = vmatpush2.bf16.msra.mxu0 0
    %285 = vmatprep.mubr.bf16.mxu0 0
    %286 = vmatmul.mubr.bf16.gmra.mxu0 %v80
    %v287 = vpop.f32.mrf.mxu0
    %v288 = vadd.f32 0.0, %v287
    %v289 = vpop.f32.mrf.mxu0
    %v290 = vpop.f32.mrf.mxu0
    %v291 = vadd.f32 0.0, %v290
    %v292 = vpop.f32.mrf.mxu0
    %293 = vdwg.mxu0
    %v294 = vpack.c.bf16 %v249, %v245
    %v295 = vpack.c.bf16 %v251, %v247
    %v296 = vpack.c.bf16 %v291, %v288
    %297 = vmatprep.subr.bf16.mxu0 0
    %298 = vmatpush1.bf16.xpose.msra.mxu0 0
    %299 = vmatprep.subr.bf16.mxu0 0
    %300 = vmatpush1.bf16.xpose.msra.mxu0 0
    %301 = vmatprep.subr.bf16.mxu0 0
    %302 = vmatpush1.bf16.xpose.msra.mxu0 0
    %303 = vmatprep.subr.bf16.mxu0 0
    %304 = vmatpush1.bf16.xpose.msra.mxu0 0
    %305 = vmatprep.subr.bf16.mxu0 0
    %306 = vmatpush1.bf16.xpose.msra.mxu0 0
    %307 = vmatprep.subr.bf16.mxu0 0
    %308 = vmatpush1.bf16.xpose.msra.mxu0 0
    %309 = vmatprep.subr.bf16.mxu0 0
    %310 = vmatpush1.bf16.xpose.msra.mxu0 0
    %311 = vmatprep.subr.bf16.mxu0 0
    %312 = vmatpush1.bf16.xpose.msra.mxu0 %v295
    %313 = vmatprep.subr.bf16.mxu0 0
    %314 = vmatpush2.bf16.xpose.msra.mxu0 0
    %315 = vmatprep.subr.bf16.mxu0 0
    %316 = vmatpush2.bf16.xpose.msra.mxu0 0
    %317 = vmatprep.subr.bf16.mxu0 0
    %318 = vmatpush2.bf16.xpose.msra.mxu0 0
    %319 = vmatprep.subr.bf16.mxu0 0
    %320 = vmatpush2.bf16.xpose.msra.mxu0 0
    %321 = vmatprep.subr.bf16.mxu0 0
    %322 = vmatpush2.bf16.xpose.msra.mxu0 0
    %323 = vmatprep.subr.bf16.mxu0 0
    %324 = vmatpush2.bf16.xpose.msra.mxu0 0
    %325 = vmatprep.subr.bf16.mxu0 0
    %326 = vmatpush2.bf16.xpose.msra.mxu0 0
    %327 = vmatprep.subr.bf16.mxu0 0
    %328 = vmatpush2.bf16.xpose.msra.mxu0 0
    %329 = vmatprep.mubr.bf16.mxu0 0
    %330 = vmatmul.mubr.bf16.gmra.mxu0 %v294
    %v331 = vpop.f32.mrf.mxu0
    %v332 = vadd.f32 0.0, %v331
    %v333 = vpop.f32.mrf.mxu0
    %v334 = vpop.f32.mrf.mxu0
    %v335 = vadd.f32 0.0, %v334
    %v336 = vpop.f32.mrf.mxu0
    %337 = vdwg.mxu0
    %v338 = vmul.f32 %v332, 0.088388346
    %v339 = vmul.f32 %v335, 0.088388346
    %v340 = vlaneseq
    %v341 = vshrl.u32 %v340, 7
    %v342 = vadd.s32 %v341, 8
    %v343 = vlaneseq
    %v344 = vand.u32 %v343, 127
    %v345 = vshra.s32 %v341, 3
    %v346 = vshra.s32 %v342, 3
    %v347 = vshra.s32 %v344, 3
    %vm348 = vcmp.eq.s32.totalorder %v345, %v347
    %vm349 = vcmp.eq.s32.totalorder %v346, %v347
    %v350 = vld [vmem:[%s1] sm:$0x1]
    %vm351 = vcmp.gt.f32.partialorder %v350, 0.5
    %vm352 = vcmp.le.s32.totalorder %v344, %v341
    %vm353 = vcmp.le.s32.totalorder %v344, %v342
    %vm354 = vmand %vm352, %vm348
    %vm355 = vmand %vm353, %vm349
    %v356 = vsel %vm351, 1, 0
    %v357 = vlaneseq
    %v358 = vshrl.u32 %v357, 7
    %v359 = vsub.s32 0, %v358
    %v360 = vrot.slane %v356, %v359
    %vm361 = vcmp.eq.s32.totalorder %v360, 1
    %vm362 = vmand %vm354, %vm361
    %vm363 = vmand %vm355, %vm361
    %v364 = vsel %vm362, %v338, -1e+09
    %v365 = vsel %vm363, %v339, -1e+09
    %vm366 = vcmask 130048
    %v367 = vsel %vm366, %v364, -inf
    %368 = vmax.xlane.f32.xlu0 %v367
    %v369 = vpop.xlane.xlu0 %368
    %v370 = vsel %vm366, %v365, -inf
    %371 = vmax.xlane.f32.xlu0 %v370
    %v372 = vpop.xlane.xlu0 %371
    %v373 = vsub.f32 %v364, %v369
    %v374 = vsub.f32 %v365, %v372
    %v375 = vmul.f32 %v373, 1.442695
    %v376 = vpow.pop %v375
    %v377 = vmul.f32 %v374, 1.442695
    %v378 = vpow.pop %v377
    %v379 = vsel %vm366, %v376, 0.0
    %380 = vadd.xlane.f32.xlu0 %v379
    %v381 = vpop.xlane.xlu0 %380
    %v382 = vsel %vm366, %v378, 0.0
    %383 = vadd.xlane.f32.xlu0 %v382
    %v384 = vpop.xlane.xlu0 %383
    %v385 = vrcp.pop %v381
    %v386 = vrcp.pop %v384
    %v387 = vmul.f32 %v376, %v385
    %v388 = vmul.f32 %v378, %v386
    %v389 = vpack.c.bf16 %v388, %v387
    %v391 = vsel %vm366, %v389, 0
    %393 = vmatprep.subr.bf16.mxu0 0
    %394 = vmatpush1.bf16.msra.mxu0 0
    %395 = vmatprep.subr.bf16.mxu0 0
    %396 = vmatpush1.bf16.msra.mxu0 0
    %397 = vmatprep.subr.bf16.mxu0 0
    %398 = vmatpush1.bf16.msra.mxu0 0
    %399 = vmatprep.subr.bf16.mxu0 0
    %400 = vmatpush1.bf16.msra.mxu0 0
    %401 = vmatprep.subr.bf16.mxu0 0
    %402 = vmatpush1.bf16.msra.mxu0 0
    %403 = vmatprep.subr.bf16.mxu0 0
    %404 = vmatpush1.bf16.msra.mxu0 0
    %405 = vmatprep.subr.bf16.mxu0 0
    %406 = vmatpush1.bf16.msra.mxu0 0
    %407 = vmatprep.subr.bf16.mxu0 0
    %408 = vmatpush1.bf16.msra.mxu0 %v296
    %409 = vmatprep.subr.bf16.mxu0 0
    %410 = vmatpush2.bf16.msra.mxu0 0
    %411 = vmatprep.subr.bf16.mxu0 0
    %412 = vmatpush2.bf16.msra.mxu0 0
    %413 = vmatprep.subr.bf16.mxu0 0
    %414 = vmatpush2.bf16.msra.mxu0 0
    %415 = vmatprep.subr.bf16.mxu0 0
    %416 = vmatpush2.bf16.msra.mxu0 0
    %417 = vmatprep.subr.bf16.mxu0 0
    %418 = vmatpush2.bf16.msra.mxu0 0
    %419 = vmatprep.subr.bf16.mxu0 0
    %420 = vmatpush2.bf16.msra.mxu0 0
    %421 = vmatprep.subr.bf16.mxu0 0
    %422 = vmatpush2.bf16.msra.mxu0 0
    %423 = vmatprep.subr.bf16.mxu0 0
    %424 = vmatpush2.bf16.msra.mxu0 0
    %425 = vmatprep.mubr.bf16.mxu0 0
    %426 = vmatmul.mubr.bf16.gmra.mxu0 %v391
    %v427 = vpop.f32.mrf.mxu0
    %v428 = vadd.f32 0.0, %v427
    %v429 = vpop.f32.mrf.mxu0
    %v430 = vpop.f32.mrf.mxu0
    %v431 = vadd.f32 0.0, %v430
    %v432 = vpop.f32.mrf.mxu0
    %433 = vdwg.mxu0
    %v434 = vpack.c.bf16 %v431, %v428
    %v435 = vld [vmem:[#allocation2 + $0xc] sm:$0xf]
    %v436 = vld [vmem:[#allocation2 + $0x1c] sm:$0xf]
    %v437 = vld [vmem:[#allocation2 + $0x2c] sm:$0xf]
    %v438 = vld [vmem:[#allocation2 + $0x3c] sm:$0xf]
    %v439 = vld [vmem:[#allocation2 + $0x4c] sm:$0xf]
    %v440 = vld [vmem:[#allocation2 + $0x5c] sm:$0xf]
    %v441 = vld [vmem:[#allocation2 + $0x6c] sm:$0xf]
    %v442 = vld [vmem:[#allocation2 + $0x7c] sm:$0xf]
    %v443 = vld [vmem:[#allocation2 + $0x8c] sm:$0xf]
    %v444 = vld [vmem:[#allocation2 + $0x9c] sm:$0xf]
    %v445 = vld [vmem:[#allocation2 + $0xac] sm:$0xf]
    %v446 = vld [vmem:[#allocation2 + $0xbc] sm:$0xf]
    %v447 = vld [vmem:[#allocation2 + $0xcc] sm:$0xf]
    %v448 = vld [vmem:[#allocation2 + $0xdc] sm:$0xf]
    %v449 = vld [vmem:[#allocation2 + $0xec] sm:$0xf]
    %v450 = vld [vmem:[#allocation2 + $0xfc] sm:$0xf]
    %v451 = vunpack.c.l.bf16 %v42
    %v452 = vunpack.c.l.bf16 %v43
    %v469 = vunpack.c.l.b16 %v435
    %v470 = vunpack.c.l.b16 %v436
    %v471 = vunpack.c.l.b16 %v437
    %v472 = vunpack.c.l.b16 %v438
    %v473 = vunpack.c.l.b16 %v439
    %v474 = vunpack.c.l.b16 %v440
    %v475 = vunpack.c.l.b16 %v441
    %v476 = vunpack.c.l.b16 %v442
    %v477 = vunpack.c.l.b16 %v443
    %v478 = vunpack.c.l.b16 %v444
    %v479 = vunpack.c.l.b16 %v445
    %v480 = vunpack.c.l.b16 %v446
    %v481 = vunpack.c.l.b16 %v447
    %v482 = vunpack.c.l.b16 %v448
    %v483 = vunpack.c.l.b16 %v449
    %v484 = vunpack.c.l.b16 %v450
    %v485 = vpack.c.b16 %v470, %v469
    %v486 = vpack.c.b16 %v472, %v471
    %v487 = vpack.c.b16 %v474, %v473
    %v488 = vpack.c.b16 %v476, %v475
    %v489 = vpack.c.b16 %v478, %v477
    %v490 = vpack.c.b16 %v480, %v479
    %v491 = vpack.c.b16 %v482, %v481
    %v492 = vpack.c.b16 %v484, %v483
    %501 = vmatprep.subr.bf16.mxu0 0
    %502 = vmatpush1.bf16.msra.mxu0 %v492
    %503 = vmatprep.subr.bf16.mxu0 0
    %504 = vmatpush1.bf16.msra.mxu0 %v491
    %505 = vmatprep.subr.bf16.mxu0 0
    %506 = vmatpush1.bf16.msra.mxu0 %v490
    %507 = vmatprep.subr.bf16.mxu0 0
    %508 = vmatpush1.bf16.msra.mxu0 %v489
    %509 = vmatprep.subr.bf16.mxu0 0
    %510 = vmatpush1.bf16.msra.mxu0 %v488
    %511 = vmatprep.subr.bf16.mxu0 0
    %512 = vmatpush1.bf16.msra.mxu0 %v487
    %513 = vmatprep.subr.bf16.mxu0 0
    %514 = vmatpush1.bf16.msra.mxu0 %v486
    %515 = vmatprep.subr.bf16.mxu0 0
    %516 = vmatpush1.bf16.msra.mxu0 %v485
    %517 = vmatprep.subr.bf16.mxu0 0
    %518 = vmatpush2.bf16.msra.mxu0 0
    %519 = vmatprep.subr.bf16.mxu0 0
    %520 = vmatpush2.bf16.msra.mxu0 0
    %521 = vmatprep.subr.bf16.mxu0 0
    %522 = vmatpush2.bf16.msra.mxu0 0
    %523 = vmatprep.subr.bf16.mxu0 0
    %524 = vmatpush2.bf16.msra.mxu0 0
    %525 = vmatprep.subr.bf16.mxu0 0
    %526 = vmatpush2.bf16.msra.mxu0 0
    %527 = vmatprep.subr.bf16.mxu0 0
    %528 = vmatpush2.bf16.msra.mxu0 0
    %529 = vmatprep.subr.bf16.mxu0 0
    %530 = vmatpush2.bf16.msra.mxu0 0
    %531 = vmatprep.subr.bf16.mxu0 0
    %532 = vmatpush2.bf16.msra.mxu0 0
    %533 = vmatprep.mubr.bf16.mxu0 0
    %534 = vmatmul.mubr.bf16.gmra.mxu0 %v434
    %v535 = vpop.f32.mrf.mxu0
    %v536 = vadd.f32 %v451, %v535
    %v537 = vpop.f32.mrf.mxu0
    %v538 = vpop.f32.mrf.mxu0
    %v539 = vadd.f32 %v452, %v538
    %v540 = vpop.f32.mrf.mxu0
    %541 = vdwg.mxu0
    %v542 = vpack.c.bf16 %v539, %v536
    %v543 = vld [vmem:[%s4] sm:$0xff]
    %v544 = vld [vmem:[%s4 + $0x8] sm:$0xff]
    %v545 = vld [vmem:[%s4 + $0x10] sm:$0xff]
    %v546 = vld [vmem:[%s4 + $0x18] sm:$0xff]
    %v547 = vld [vmem:[%s4 + $0x20] sm:$0xff]
    %v548 = vld [vmem:[%s4 + $0x28] sm:$0xff]
    %v549 = vld [vmem:[%s4 + $0x30] sm:$0xff]
    %v550 = vld [vmem:[%s4 + $0x38] sm:$0xff]
    %v551 = vld [vmem:[%s4 + $0x40] sm:$0xff]
    %v552 = vld [vmem:[%s4 + $0x48] sm:$0xff]
    %v553 = vld [vmem:[%s4 + $0x50] sm:$0xff]
    %v554 = vld [vmem:[%s4 + $0x58] sm:$0xff]
    %v555 = vld [vmem:[%s4 + $0x60] sm:$0xff]
    %v556 = vld [vmem:[%s4 + $0x68] sm:$0xff]
    %v557 = vld [vmem:[%s4 + $0x70] sm:$0xff]
    %v558 = vld [vmem:[%s4 + $0x78] sm:$0xff]
    %v559 = vld [vmem:[%s5] sm:$0x3]
    %v561 = vlaneseq
    %v562 = vshrl.u32 %v561, 7
    %v563 = vsub.s32 0, %v562
    %v564 = vrot.slane %v559, %v563
    %v565 = vlaneseq
    %v566 = vshrl.u32 %v565, 7
    %v567 = vsub.s32 1, %v566
    %v568 = vrot.slane %v559, %v567
    %v587 = vunpack.c.l.b16 %v543
    %v588 = vunpack.c.h.b16 %v543
    %v589 = vunpack.c.l.b16 %v544
    %v590 = vunpack.c.h.b16 %v544
    %v591 = vunpack.c.l.b16 %v545
    %v592 = vunpack.c.h.b16 %v545
    %v593 = vunpack.c.l.b16 %v546
    %v594 = vunpack.c.h.b16 %v546
    %v595 = vunpack.c.l.b16 %v547
    %v596 = vunpack.c.h.b16 %v547
    %v597 = vunpack.c.l.b16 %v548
    %v598 = vunpack.c.h.b16 %v548
    %v599 = vunpack.c.l.b16 %v549
    %v600 = vunpack.c.h.b16 %v549
    %v601 = vunpack.c.l.b16 %v550
    %v602 = vunpack.c.h.b16 %v550
    %v603 = vunpack.c.l.b16 %v551
    %v604 = vunpack.c.h.b16 %v551
    %v605 = vunpack.c.l.b16 %v552
    %v606 = vunpack.c.h.b16 %v552
    %v607 = vunpack.c.l.b16 %v553
    %v608 = vunpack.c.h.b16 %v553
    %v609 = vunpack.c.l.b16 %v554
    %v610 = vunpack.c.h.b16 %v554
    %v611 = vunpack.c.l.b16 %v555
    %v612 = vunpack.c.h.b16 %v555
    %v613 = vunpack.c.l.b16 %v556
    %v614 = vunpack.c.h.b16 %v556
    %v615 = vunpack.c.l.b16 %v557
    %v616 = vunpack.c.h.b16 %v557
    %v617 = vunpack.c.l.b16 %v558
    %v618 = vunpack.c.h.b16 %v558
    %v619 = vpack.c.b16 %v589, %v587
    %v620 = vpack.c.b16 %v590, %v588
    %v621 = vpack.c.b16 %v593, %v591
    %v622 = vpack.c.b16 %v594, %v592
    %v623 = vpack.c.b16 %v597, %v595
    %v624 = vpack.c.b16 %v598, %v596
    %v625 = vpack.c.b16 %v601, %v599
    %v626 = vpack.c.b16 %v602, %v600
    %v627 = vpack.c.b16 %v605, %v603
    %v628 = vpack.c.b16 %v606, %v604
    %v629 = vpack.c.b16 %v609, %v607
    %v630 = vpack.c.b16 %v610, %v608
    %v631 = vpack.c.b16 %v613, %v611
    %v632 = vpack.c.b16 %v614, %v612
    %v633 = vpack.c.b16 %v617, %v615
    %v634 = vpack.c.b16 %v618, %v616
    %651 = vmatprep.subr.bf16.mxu0 %v634
    %652 = vmatpush1.bf16.msra.mxu0 %v633
    %653 = vmatprep.subr.bf16.mxu0 %v632
    %654 = vmatpush1.bf16.msra.mxu0 %v631
    %655 = vmatprep.subr.bf16.mxu0 %v630
    %656 = vmatpush1.bf16.msra.mxu0 %v629
    %657 = vmatprep.subr.bf16.mxu0 %v628
    %658 = vmatpush1.bf16.msra.mxu0 %v627
    %659 = vmatprep.subr.bf16.mxu0 %v626
    %660 = vmatpush1.bf16.msra.mxu0 %v625
    %661 = vmatprep.subr.bf16.mxu0 %v624
    %662 = vmatpush1.bf16.msra.mxu0 %v623
    %663 = vmatprep.subr.bf16.mxu0 %v622
    %664 = vmatpush1.bf16.msra.mxu0 %v621
    %665 = vmatprep.subr.bf16.mxu0 %v620
    %666 = vmatpush1.bf16.msra.mxu0 %v619
    %667 = vmatprep.subr.bf16.mxu0 0
    %668 = vmatpush2.bf16.msra.mxu0 0
    %669 = vmatprep.subr.bf16.mxu0 0
    %670 = vmatpush2.bf16.msra.mxu0 0
    %671 = vmatprep.subr.bf16.mxu0 0
    %672 = vmatpush2.bf16.msra.mxu0 0
    %673 = vmatprep.subr.bf16.mxu0 0
    %674 = vmatpush2.bf16.msra.mxu0 0
    %675 = vmatprep.subr.bf16.mxu0 0
    %676 = vmatpush2.bf16.msra.mxu0 0
    %677 = vmatprep.subr.bf16.mxu0 0
    %678 = vmatpush2.bf16.msra.mxu0 0
    %679 = vmatprep.subr.bf16.mxu0 0
    %680 = vmatpush2.bf16.msra.mxu0 0
    %681 = vmatprep.subr.bf16.mxu0 0
    %682 = vmatpush2.bf16.msra.mxu0 0
    %683 = vmatprep.mubr.bf16.mxu0 0
    %684 = vmatmul.mubr.bf16.gmra.mxu0 %v542
    %v685 = vpop.f32.mrf.mxu0
    %v686 = vadd.f32 %v564, %v685
    %v687 = vpop.f32.mrf.mxu0
    %v688 = vadd.f32 %v568, %v687
    %v689 = vpop.f32.mrf.mxu0
    %v690 = vadd.f32 %v564, %v689
    %v691 = vpop.f32.mrf.mxu0
    %v692 = vadd.f32 %v568, %v691
    %693 = vdwg.mxu0
    %694 = vst [vmem:[#allocation6] sm:$0xff] %v686
    %695 = vst [vmem:[#allocation6 + $0x8] sm:$0xff] %v688
    %696 = vst [vmem:[#allocation6 + $0x10] sm:$0xff] %v690
    %697 = vst [vmem:[#allocation6 + $0x18] sm:$0xff] %v692
    %v698 = vmax.f32 %v686, %v688
    %699 = vmax.xlane.f32.xlu0 %v698
    %v700 = vpop.xlane.xlu0 %699
    %v701 = vmax.f32 %v690, %v692
    %702 = vmax.xlane.f32.xlu0 %v701
    %v703 = vpop.xlane.xlu0 %702
    %v704 = vsub.f32 %v686, %v700
    %v705 = vsub.f32 %v688, %v700
    %v706 = vsub.f32 %v690, %v703
    %v707 = vsub.f32 %v692, %v703
    %v708 = vmul.f32 %v704, 1.442695
    %v709 = vpow.pop %v708
    %v710 = vmul.f32 %v705, 1.442695
    %v711 = vpow.pop %v710
    %v712 = vmul.f32 %v706, 1.442695
    %v713 = vpow.pop %v712
    %v714 = vmul.f32 %v707, 1.442695
    %v715 = vpow.pop %v714
    %v716 = vadd.f32 %v709, %v711
    %717 = vadd.xlane.f32.xlu0 %v716
    %v718 = vpop.xlane.xlu0 %717
    %v719 = vadd.f32 %v713, %v715
    %720 = vadd.xlane.f32.xlu0 %v719
    %v721 = vpop.xlane.xlu0 %720
    %v722 = vlog2.pop %v718
    %v723 = vmul.f32 %v722, 0.6931472
    %v724 = vlog2.pop %v721
    %v725 = vmul.f32 %v724, 0.6931472
    %v726 = vsub.f32 %v704, %v723
    %v727 = vsub.f32 %v705, %v723
    %v728 = vsub.f32 %v706, %v725
    %v729 = vsub.f32 %v707, %v725
    %v730 = vld [vmem:[%s2] sm:$0xff]
    %v731 = vld [vmem:[%s2 + $0x8] sm:$0xff]
    %v732 = vadd.s32 %v344, 128
    %733 = vset.pattern.permute.xlu0 0
    %734 = vperm.xlu0 %733, %v730
    %v735 = vpop.permute.xlu0 %734
    %736 = vset.pattern.permute.xlu0 0
    %737 = vperm.xlu0 %736, %v731
    %v738 = vpop.permute.xlu0 %737
    %vm739 = vcmp.eq.s32.totalorder %v344, %v735
    %vm740 = vcmp.eq.s32.totalorder %v732, %v735
    %vm741 = vcmp.eq.s32.totalorder %v344, %v738
    %vm742 = vcmp.eq.s32.totalorder %v732, %v738
    %v743 = vsel %vm739, %v726, 0.0
    %v744 = vsel %vm740, %v727, 0.0
    %v745 = vsel %vm741, %v728, 0.0
    %v746 = vsel %vm742, %v729, 0.0
    %v747 = vadd.f32 %v743, %v744
    %748 = vadd.xlane.f32.xlu0 %v747
    %v749 = vpop.xlane.xlu0 %748
    %v750 = vadd.f32 %v745, %v746
    %751 = vadd.xlane.f32.xlu0 %v750
    %v752 = vpop.xlane.xlu0 %751
    %vm753 = vcmp.ge.s32.totalorder %v730, 0
    %vm754 = vcmp.ge.s32.totalorder %v731, 0
    %v755 = vsel %vm753, 1, 0
    %v756 = vsel %vm754, 1, 0
    %v757 = vcvt.s32.f32 %v755
    %v758 = vcvt.s32.f32 %v756
    %v759 = vmul.f32 %v749, %v757
    %v760 = vmul.f32 %v752, %v758
    %vm761 = vcmask 7168
    %v762 = vsel %vm761, %v759, 0.0
    %v763 = vsel %vm761, %v760, 0.0
    %v764 = vadd.f32 %v762, %v763
    %765 = vadd.xlane.f32.xlu0 %v764
    %v766 = vpop.xlane.xlu0 %765
    %v767 = vrot.slane %v766, 4
    %v768 = vadd.f32 %v766, %v767
    %v769 = vrot.slane %v768, 2
    %v770 = vadd.f32 %v768, %v769
    %v771 = vrot.slane %v770, 1
    %v772 = vadd.f32 %v770, %v771
    %s773 = vtos %v772
    %s774 = ssub.f32 0.0, %s773
    %v775 = vsel %vm761, %v757, 0.0
    %v776 = vsel %vm761, %v758, 0.0
    %v777 = vadd.f32 %v775, %v776
    %778 = vadd.xlane.f32.xlu0 %v777
    %v779 = vpop.xlane.xlu0 %778
    %v780 = vrot.slane %v779, 4
    %v781 = vadd.f32 %v779, %v780
    %v782 = vrot.slane %v781, 2
    %v783 = vadd.f32 %v781, %v782
    %v784 = vrot.slane %v783, 1
    %v785 = vadd.f32 %v783, %v784
    %s786 = vtos %v785
    %s787 = smax.f32 %s786, 1.0
    %v788 = vstv %s787
    %v789 = vrcp.pop %v788
    %s790 = vtos %v789
    %s791 = smul.f32 %s774, %s790
    %s792 = scalar_lea.smem [#allocation7], 0
    %793 = sst [smem:[%s792]] %s791
    // Predicated region
    $region30: #{headline_generator_forward.1} parent=1 // pred_check
      _
    $region31: #{headline_generator_forward.1} parent=1 // pred_check_branch
      %795 = sbr.rel (0) target = $region33
    $region32: #{headline_generator_forward.1} parent=1 // pred_region
      %s797 = ssub.s32 512, 512
      %798 = vsyncadd [#allocation4], %s797
      %s799 = sshll.u32 [#allocation6], 4
      %s800 = int_to_ptr.vmem [resolvable:$true] %s799
      %805 = dma.vmem_to_hbm [thread:$0]  %s800, 512, %s6, [#allocation4], 256, 256, 16
    $region33: #{headline_generator_forward.1} parent=1 // pred_fallthru
      _
    // Predicated region
    $region34: #{headline_generator_forward.1} parent=1 // pred_check
      _
    $region35: #{headline_generator_forward.1} parent=1 // pred_check_branch
      %807 = sbr.rel (0) target = $region37
    $region36: #{headline_generator_forward.1} parent=1 // pred_region
      %s809 = ssub.s32 16, 16
      %810 = vsyncadd [#allocation5], %s809
      %813 = dma.smem_to_hbm [#allocation7], 16, %s7, [#allocation5]
    $region37: #{headline_generator_forward.1} parent=1 // pred_fallthru
      _
    // Predicated region
    $region38: #{headline_generator_forward.1} parent=1 // pred_check
      _
    $region39: #{headline_generator_forward.1} parent=1 // pred_check_branch
      %815 = sbr.rel (0) target = $region41
    $region40: #{headline_generator_forward.1} parent=1 // pred_region
      %816 = dma.done [#allocation4], 512
    $region41: #{headline_generator_forward.1} parent=1 // pred_fallthru
      _
    // Predicated region
    $region42: #{headline_generator_forward.1} parent=1 // pred_check
      _
    $region43: #{headline_generator_forward.1} parent=1 // pred_check_branch
      %818 = sbr.rel (0) target = $region45
    $region44: #{headline_generator_forward.1} parent=1 // pred_region
      %819 = dma.done [#allocation5], 16
    $region45: #{headline_generator_forward.1} parent=1 // pred_fallthru
      _
    %820 = sfence
    %821 = vsyncpa [#allocation3], 1
    %822 = vsyncpa [#allocation4], 1
    %823 = vsyncpa [#allocation5], 1

</llo_original>
